<compile_context>
chip_gen: v5e
topology: v5e:2x2
jax: 0.10.0
libtpu: 0.0.40
codegen_flags: <defaults>
</compile_context>

<pallas_src>
import jax
import jax.numpy as jnp
from jax import lax
from jax.experimental import pallas as pl
from jax.experimental.pallas import tpu as pltpu


def _silu(y):
    """Numerically stable y * sigmoid(y) (no inf intermediates for large |y|)."""
    e = jnp.exp(-jnp.abs(y))
    return y * jnp.where(y >= 0, 1.0, e) / (1.0 + e)


def fold_bn(gamma, beta, mean, var, eps=1e-5):
    scale = gamma / jnp.sqrt(var + eps)
    bias = beta - mean * scale
    return scale, bias


# ---------------- fused Pallas kernel + wrapper ----------------

def blaze_block_forward(x, params, stride=1):
    """BlazeBlock.forward for stride == 1 (identity shortcut)."""
    assert stride == 1
    N, C, H, W = x.shape

    wd = params['wd']                            # (mid, 1, K, K), groups = in_channels
    mid, K = wd.shape[0], wd.shape[-1]
    assert mid == C, "only mid_channels == in_channels (pure depthwise) supported"
    P = (K - 1) // 2
    KK = K * K
    w2 = params['w2']                            # (Cout, mid, 1, 1)
    Cout = w2.shape[0]
    assert Cout == C, "stride=1 identity shortcut requires out_channels == in_channels"
    NC, HW = N * C, H * W
    center = P * K + P

    # ---- fold eval-mode BatchNorm into conv weights / biases (host side) ----
    s1, t1 = fold_bn(**params['bn1'])
    s2, t2 = fold_bn(**params['bn2'])
    wd_s = wd[:, 0] * s1[:, None, None]          # (C, K, K)  BN1 scale folded
    b1 = params['bd'] * s1 + t1                  # (C,)       folded BN1 bias
    w2_s = w2[:, :, 0, 0] * s2[:, None]          # (Cout, C)  BN2 scale folded
    b2 = params['b2'] * s2 + t2                  # (Cout,)    folded BN2 bias

    # ---- pack everything into a few dense, lane-friendly 2D operands ----
    # Activations: row r = n*C + c, lane axis = flattened H*W (lane-dense, free reshape).
    x2d = x.reshape(NC, HW)
    # Depthwise tap weights per (n,c) row + folded BN1 bias as the last column.
    wd_packed = jnp.concatenate(
        [jnp.tile(wd_s.reshape(C, KK), (N, 1)), jnp.tile(b1, N)[:, None]], axis=1)
    # 1x1 conv as per-batch block-diagonal scatter columns + folded BN2 bias column.
    w2_packed = jnp.concatenate(
        [jnp.kron(jnp.eye(N, dtype=w2_s.dtype), w2_s), jnp.tile(b2, N)[:, None]],
        axis=1)
    # 0/1 halo masks per tap over the flattened spatial axis (zero-padding semantics).
    pos = jnp.arange(HW)
    rr, cc = pos // W, pos % W
    masks = jnp.stack([
        ((rr + (i - P) >= 0) & (rr + (i - P) < H) &
         (cc + (j - P) >= 0) & (cc + (j - P) < W)).astype(jnp.float32)
        for i in range(K) for j in range(K)])    # (KK, HW)

    def kernel(x_ref, wd_ref, w2_ref, m_ref, o_ref):
        xv = x_ref[...]                          # (NC, HW) lane-dense activations
        wdv = wd_ref[...]                        # (NC, KK+1)
        w2v = w2_ref[...]                        # (NC, NC+1)

        # Depthwise KxK conv + folded BN1. Center tap needs no roll / mask.
        acc = xv * wdv[:, center:center + 1]
        for t in range(KK):
            if t == center:
                continue
            d = (t // K - P) * W + (t % K - P)             # flat tap offset
            shifted = pltpu.roll(xv, shift=(-d) % HW, axis=1)   # XLU lane rotation
            acc = acc + (shifted * m_ref[t:t + 1, :]) * wdv[:, t:t + 1]
        y = acc + wdv[:, KK:KK + 1]                        # + folded BN1 bias

        # 1x1 conv (+ folded BN2 bias) + identity residual, then SiLU epilogue.
        z = xv + w2v[:, NC:NC + 1]
        for r in range(NC):
            z = z + w2v[:, r:r + 1] * y[r:r + 1, :]
        o_ref[...] = _silu(z)

    out2d = pl.pallas_call(
        kernel,
        out_shape=jax.ShapeDtypeStruct((NC, HW), jnp.float32),
        in_specs=[
            pl.BlockSpec((NC, HW), lambda: (0, 0)),
            pl.BlockSpec((NC, KK + 1), lambda: (0, 0)),
            pl.BlockSpec((NC, NC + 1), lambda: (0, 0)),
            pl.BlockSpec((KK, HW), lambda: (0, 0)),
        ],
        out_specs=pl.BlockSpec((NC, HW), lambda: (0, 0)),
    )(x2d, wd_packed, w2_packed, masks)
    return out2d.reshape(N, C, H, W)


# ---------------- parameters ----------------

def init_params(key, in_channels, out_channels, mid_channels=None):
    mid = mid_channels or in_channels
    keys = jax.random.split(key, 12)

    def normal(k, shape, s=0.1):
        return s * jax.random.normal(k, shape, jnp.float32)

    def bn_params(k0, k1, k2, k3, c):
        return dict(gamma=1.0 + normal(keys[k0], (c,)),
                    beta=normal(keys[k1], (c,)),
                    mean=normal(keys[k2], (c,)),
                    var=jnp.abs(normal(keys[k3], (c,))) + 1.0)

    return {
        'wd': normal(keys[0], (mid, 1, 5, 5)),          # depthwise 5x5 (groups=in)
        'bd': normal(keys[1], (mid,)),
        'bn1': bn_params(2, 3, 4, 5, mid),
        'w2': normal(keys[6], (out_channels, mid, 1, 1)),
        'b2': normal(keys[7], (out_channels,)),
        'bn2': bn_params(8, 9, 10, 11, out_channels),
    }


# ---------------- pure-JAX reference (for correctness check) ----------------

def ref_forward(x, params, eps=1e-5):
    dn = ('NCHW', 'OIHW', 'NCHW')
    C = x.shape[1]

    def bn(y, d):
        g = d['gamma'].reshape(1, -1, 1, 1)
        b = d['beta'].reshape(1, -1, 1, 1)
        m = d['mean'].reshape(1, -1, 1, 1)
        v = d['var'].reshape(1, -1, 1, 1)
        return (y - m) / jnp.sqrt(v + eps) * g + b

    y = lax.conv_general_dilated(x, params['wd'], (1, 1), ((2, 2), (2, 2)),
                                 dimension_numbers=dn, feature_group_count=C)
    y = bn(y + params['bd'].reshape(1, -1, 1, 1), params['bn1'])
    z = lax.conv_general_dilated(y, params['w2'], (1, 1), 'VALID',
                                 dimension_numbers=dn)
    z = bn(z + params['b2'].reshape(1, -1, 1, 1), params['bn2'])
    out = z + x
    return out * jax.nn.sigmoid(out)


if __name__ == "__main__":
    key = jax.random.PRNGKey(0)
    kx, kp = jax.random.split(key)

    N, C, H, W = 2, 4, 16, 16
    x = jax.random.normal(kx, (N, C, H, W), jnp.float32)
    params = init_params(kp, in_channels=C, out_channels=C)

    out = blaze_block_forward(x, params, stride=1)
    out = jax.block_until_ready(out)

    ref = ref_forward(x, params)
    assert out.shape == (N, C, H, W)
    assert bool(jnp.allclose(out, ref, atol=1e-4, rtol=1e-4)), "mismatch vs reference"
    print("KERNEL_OK")
</pallas_src>

<mosaic_0001>
module attributes {stable_mosaic.version = 11 : i64} {
  func.func @kernel(%arg0: memref<8x256xf32, #tpu.memory_space<vmem>>, %arg1: memref<8x26xf32, #tpu.memory_space<vmem>>, %arg2: memref<8x9xf32, #tpu.memory_space<vmem>>, %arg3: memref<25x256xf32, #tpu.memory_space<vmem>>, %arg4: memref<8x256xf32, #tpu.memory_space<vmem>>) attributes {dimension_semantics = [], scalar_prefetch = 0 : i64, scratch_operands = 0 : i64, tpu.core_type = #tpu.core_type<tc>} {
    %c0 = arith.constant 0 : index
    %c0_0 = arith.constant 0 : index
    %0 = vector.load %arg0[%c0, %c0_0] : memref<8x256xf32, #tpu.memory_space<vmem>>, vector<8x256xf32>
    %c0_1 = arith.constant 0 : index
    %c0_2 = arith.constant 0 : index
    %1 = vector.load %arg1[%c0_1, %c0_2] : memref<8x26xf32, #tpu.memory_space<vmem>>, vector<8x26xf32>
    %c0_3 = arith.constant 0 : index
    %c0_4 = arith.constant 0 : index
    %2 = vector.load %arg2[%c0_3, %c0_4] : memref<8x9xf32, #tpu.memory_space<vmem>>, vector<8x9xf32>
    %3 = vector.extract_strided_slice %1 {offsets = [0, 12], sizes = [8, 1], strides = [1, 1]} : vector<8x26xf32> to vector<8x1xf32>
    %4 = vector.broadcast %3 : vector<8x1xf32> to vector<8x256xf32>
    %5 = arith.mulf %0, %4 : vector<8x256xf32>
    %c34_i32 = arith.constant 34 : i32
    %6 = tpu.dynamic_rotate %0 by %c34_i32 dim 1 : vector<8x256xf32>, i32 -> vector<8x256xf32>
    %c0_5 = arith.constant 0 : index
    %c0_6 = arith.constant 0 : index
    %7 = vector.load %arg3[%c0_5, %c0_6] : memref<25x256xf32, #tpu.memory_space<vmem>>, vector<1x256xf32>
    %8 = vector.broadcast %7 : vector<1x256xf32> to vector<8x256xf32>
    %9 = arith.mulf %6, %8 : vector<8x256xf32>
    %10 = vector.extract_strided_slice %1 {offsets = [0, 0], sizes = [8, 1], strides = [1, 1]} : vector<8x26xf32> to vector<8x1xf32>
    %11 = vector.broadcast %10 : vector<8x1xf32> to vector<8x256xf32>
    %12 = arith.mulf %9, %11 : vector<8x256xf32>
    %13 = arith.addf %5, %12 : vector<8x256xf32>
    %c33_i32 = arith.constant 33 : i32
    %14 = tpu.dynamic_rotate %0 by %c33_i32 dim 1 : vector<8x256xf32>, i32 -> vector<8x256xf32>
    %c1 = arith.constant 1 : index
    %c0_7 = arith.constant 0 : index
    %15 = vector.load %arg3[%c1, %c0_7] : memref<25x256xf32, #tpu.memory_space<vmem>>, vector<1x256xf32>
    %16 = vector.broadcast %15 : vector<1x256xf32> to vector<8x256xf32>
    %17 = arith.mulf %14, %16 : vector<8x256xf32>
    %18 = vector.extract_strided_slice %1 {offsets = [0, 1], sizes = [8, 1], strides = [1, 1]} : vector<8x26xf32> to vector<8x1xf32>
    %19 = vector.broadcast %18 : vector<8x1xf32> to vector<8x256xf32>
    %20 = arith.mulf %17, %19 : vector<8x256xf32>
    %21 = arith.addf %13, %20 : vector<8x256xf32>
    %c32_i32 = arith.constant 32 : i32
    %22 = tpu.dynamic_rotate %0 by %c32_i32 dim 1 : vector<8x256xf32>, i32 -> vector<8x256xf32>
    %c2 = arith.constant 2 : index
    %c0_8 = arith.constant 0 : index
    %23 = vector.load %arg3[%c2, %c0_8] : memref<25x256xf32, #tpu.memory_space<vmem>>, vector<1x256xf32>
    %24 = vector.broadcast %23 : vector<1x256xf32> to vector<8x256xf32>
    %25 = arith.mulf %22, %24 : vector<8x256xf32>
    %26 = vector.extract_strided_slice %1 {offsets = [0, 2], sizes = [8, 1], strides = [1, 1]} : vector<8x26xf32> to vector<8x1xf32>
    %27 = vector.broadcast %26 : vector<8x1xf32> to vector<8x256xf32>
    %28 = arith.mulf %25, %27 : vector<8x256xf32>
    %29 = arith.addf %21, %28 : vector<8x256xf32>
    %c31_i32 = arith.constant 31 : i32
    %30 = tpu.dynamic_rotate %0 by %c31_i32 dim 1 : vector<8x256xf32>, i32 -> vector<8x256xf32>
    %c3 = arith.constant 3 : index
    %c0_9 = arith.constant 0 : index
    %31 = vector.load %arg3[%c3, %c0_9] : memref<25x256xf32, #tpu.memory_space<vmem>>, vector<1x256xf32>
    %32 = vector.broadcast %31 : vector<1x256xf32> to vector<8x256xf32>
    %33 = arith.mulf %30, %32 : vector<8x256xf32>
    %34 = vector.extract_strided_slice %1 {offsets = [0, 3], sizes = [8, 1], strides = [1, 1]} : vector<8x26xf32> to vector<8x1xf32>
    %35 = vector.broadcast %34 : vector<8x1xf32> to vector<8x256xf32>
    %36 = arith.mulf %33, %35 : vector<8x256xf32>
    %37 = arith.addf %29, %36 : vector<8x256xf32>
    %c30_i32 = arith.constant 30 : i32
    %38 = tpu.dynamic_rotate %0 by %c30_i32 dim 1 : vector<8x256xf32>, i32 -> vector<8x256xf32>
    %c4 = arith.constant 4 : index
    %c0_10 = arith.constant 0 : index
    %39 = vector.load %arg3[%c4, %c0_10] : memref<25x256xf32, #tpu.memory_space<vmem>>, vector<1x256xf32>
    %40 = vector.broadcast %39 : vector<1x256xf32> to vector<8x256xf32>
    %41 = arith.mulf %38, %40 : vector<8x256xf32>
    %42 = vector.extract_strided_slice %1 {offsets = [0, 4], sizes = [8, 1], strides = [1, 1]} : vector<8x26xf32> to vector<8x1xf32>
    %43 = vector.broadcast %42 : vector<8x1xf32> to vector<8x256xf32>
    %44 = arith.mulf %41, %43 : vector<8x256xf32>
    %45 = arith.addf %37, %44 : vector<8x256xf32>
    %c18_i32 = arith.constant 18 : i32
    %46 = tpu.dynamic_rotate %0 by %c18_i32 dim 1 : vector<8x256xf32>, i32 -> vector<8x256xf32>
    %c5 = arith.constant 5 : index
    %c0_11 = arith.constant 0 : index
    %47 = vector.load %arg3[%c5, %c0_11] : memref<25x256xf32, #tpu.memory_space<vmem>>, vector<1x256xf32>
    %48 = vector.broadcast %47 : vector<1x256xf32> to vector<8x256xf32>
    %49 = arith.mulf %46, %48 : vector<8x256xf32>
    %50 = vector.extract_strided_slice %1 {offsets = [0, 5], sizes = [8, 1], strides = [1, 1]} : vector<8x26xf32> to vector<8x1xf32>
    %51 = vector.broadcast %50 : vector<8x1xf32> to vector<8x256xf32>
    %52 = arith.mulf %49, %51 : vector<8x256xf32>
    %53 = arith.addf %45, %52 : vector<8x256xf32>
    %c17_i32 = arith.constant 17 : i32
    %54 = tpu.dynamic_rotate %0 by %c17_i32 dim 1 : vector<8x256xf32>, i32 -> vector<8x256xf32>
    %c6 = arith.constant 6 : index
    %c0_12 = arith.constant 0 : index
    %55 = vector.load %arg3[%c6, %c0_12] : memref<25x256xf32, #tpu.memory_space<vmem>>, vector<1x256xf32>
    %56 = vector.broadcast %55 : vector<1x256xf32> to vector<8x256xf32>
    %57 = arith.mulf %54, %56 : vector<8x256xf32>
    %58 = vector.extract_strided_slice %1 {offsets = [0, 6], sizes = [8, 1], strides = [1, 1]} : vector<8x26xf32> to vector<8x1xf32>
    %59 = vector.broadcast %58 : vector<8x1xf32> to vector<8x256xf32>
    %60 = arith.mulf %57, %59 : vector<8x256xf32>
    %61 = arith.addf %53, %60 : vector<8x256xf32>
    %c16_i32 = arith.constant 16 : i32
    %62 = tpu.dynamic_rotate %0 by %c16_i32 dim 1 : vector<8x256xf32>, i32 -> vector<8x256xf32>
    %c7 = arith.constant 7 : index
    %c0_13 = arith.constant 0 : index
    %63 = vector.load %arg3[%c7, %c0_13] : memref<25x256xf32, #tpu.memory_space<vmem>>, vector<1x256xf32>
    %64 = vector.broadcast %63 : vector<1x256xf32> to vector<8x256xf32>
    %65 = arith.mulf %62, %64 : vector<8x256xf32>
    %66 = vector.extract_strided_slice %1 {offsets = [0, 7], sizes = [8, 1], strides = [1, 1]} : vector<8x26xf32> to vector<8x1xf32>
    %67 = vector.broadcast %66 : vector<8x1xf32> to vector<8x256xf32>
    %68 = arith.mulf %65, %67 : vector<8x256xf32>
    %69 = arith.addf %61, %68 : vector<8x256xf32>
    %c15_i32 = arith.constant 15 : i32
    %70 = tpu.dynamic_rotate %0 by %c15_i32 dim 1 : vector<8x256xf32>, i32 -> vector<8x256xf32>
    %c8 = arith.constant 8 : index
    %c0_14 = arith.constant 0 : index
    %71 = vector.load %arg3[%c8, %c0_14] : memref<25x256xf32, #tpu.memory_space<vmem>>, vector<1x256xf32>
    %72 = vector.broadcast %71 : vector<1x256xf32> to vector<8x256xf32>
    %73 = arith.mulf %70, %72 : vector<8x256xf32>
    %74 = vector.extract_strided_slice %1 {offsets = [0, 8], sizes = [8, 1], strides = [1, 1]} : vector<8x26xf32> to vector<8x1xf32>
    %75 = vector.broadcast %74 : vector<8x1xf32> to vector<8x256xf32>
    %76 = arith.mulf %73, %75 : vector<8x256xf32>
    %77 = arith.addf %69, %76 : vector<8x256xf32>
    %c14_i32 = arith.constant 14 : i32
    %78 = tpu.dynamic_rotate %0 by %c14_i32 dim 1 : vector<8x256xf32>, i32 -> vector<8x256xf32>
    %c9 = arith.constant 9 : index
    %c0_15 = arith.constant 0 : index
    %79 = vector.load %arg3[%c9, %c0_15] : memref<25x256xf32, #tpu.memory_space<vmem>>, vector<1x256xf32>
    %80 = vector.broadcast %79 : vector<1x256xf32> to vector<8x256xf32>
    %81 = arith.mulf %78, %80 : vector<8x256xf32>
    %82 = vector.extract_strided_slice %1 {offsets = [0, 9], sizes = [8, 1], strides = [1, 1]} : vector<8x26xf32> to vector<8x1xf32>
    %83 = vector.broadcast %82 : vector<8x1xf32> to vector<8x256xf32>
    %84 = arith.mulf %81, %83 : vector<8x256xf32>
    %85 = arith.addf %77, %84 : vector<8x256xf32>
    %c2_i32 = arith.constant 2 : i32
    %86 = tpu.dynamic_rotate %0 by %c2_i32 dim 1 : vector<8x256xf32>, i32 -> vector<8x256xf32>
    %c10 = arith.constant 10 : index
    %c0_16 = arith.constant 0 : index
    %87 = vector.load %arg3[%c10, %c0_16] : memref<25x256xf32, #tpu.memory_space<vmem>>, vector<1x256xf32>
    %88 = vector.broadcast %87 : vector<1x256xf32> to vector<8x256xf32>
    %89 = arith.mulf %86, %88 : vector<8x256xf32>
    %90 = vector.extract_strided_slice %1 {offsets = [0, 10], sizes = [8, 1], strides = [1, 1]} : vector<8x26xf32> to vector<8x1xf32>
    %91 = vector.broadcast %90 : vector<8x1xf32> to vector<8x256xf32>
    %92 = arith.mulf %89, %91 : vector<8x256xf32>
    %93 = arith.addf %85, %92 : vector<8x256xf32>
    %c1_i32 = arith.constant 1 : i32
    %94 = tpu.dynamic_rotate %0 by %c1_i32 dim 1 : vector<8x256xf32>, i32 -> vector<8x256xf32>
    %c11 = arith.constant 11 : index
    %c0_17 = arith.constant 0 : index
    %95 = vector.load %arg3[%c11, %c0_17] : memref<25x256xf32, #tpu.memory_space<vmem>>, vector<1x256xf32>
    %96 = vector.broadcast %95 : vector<1x256xf32> to vector<8x256xf32>
    %97 = arith.mulf %94, %96 : vector<8x256xf32>
    %98 = vector.extract_strided_slice %1 {offsets = [0, 11], sizes = [8, 1], strides = [1, 1]} : vector<8x26xf32> to vector<8x1xf32>
    %99 = vector.broadcast %98 : vector<8x1xf32> to vector<8x256xf32>
    %100 = arith.mulf %97, %99 : vector<8x256xf32>
    %101 = arith.addf %93, %100 : vector<8x256xf32>
    %c255_i32 = arith.constant 255 : i32
    %102 = tpu.dynamic_rotate %0 by %c255_i32 dim 1 : vector<8x256xf32>, i32 -> vector<8x256xf32>
    %c13 = arith.constant 13 : index
    %c0_18 = arith.constant 0 : index
    %103 = vector.load %arg3[%c13, %c0_18] : memref<25x256xf32, #tpu.memory_space<vmem>>, vector<1x256xf32>
    %104 = vector.broadcast %103 : vector<1x256xf32> to vector<8x256xf32>
    %105 = arith.mulf %102, %104 : vector<8x256xf32>
    %106 = vector.extract_strided_slice %1 {offsets = [0, 13], sizes = [8, 1], strides = [1, 1]} : vector<8x26xf32> to vector<8x1xf32>
    %107 = vector.broadcast %106 : vector<8x1xf32> to vector<8x256xf32>
    %108 = arith.mulf %105, %107 : vector<8x256xf32>
    %109 = arith.addf %101, %108 : vector<8x256xf32>
    %c254_i32 = arith.constant 254 : i32
    %110 = tpu.dynamic_rotate %0 by %c254_i32 dim 1 : vector<8x256xf32>, i32 -> vector<8x256xf32>
    %c14 = arith.constant 14 : index
    %c0_19 = arith.constant 0 : index
    %111 = vector.load %arg3[%c14, %c0_19] : memref<25x256xf32, #tpu.memory_space<vmem>>, vector<1x256xf32>
    %112 = vector.broadcast %111 : vector<1x256xf32> to vector<8x256xf32>
    %113 = arith.mulf %110, %112 : vector<8x256xf32>
    %114 = vector.extract_strided_slice %1 {offsets = [0, 14], sizes = [8, 1], strides = [1, 1]} : vector<8x26xf32> to vector<8x1xf32>
    %115 = vector.broadcast %114 : vector<8x1xf32> to vector<8x256xf32>
    %116 = arith.mulf %113, %115 : vector<8x256xf32>
    %117 = arith.addf %109, %116 : vector<8x256xf32>
    %c242_i32 = arith.constant 242 : i32
    %118 = tpu.dynamic_rotate %0 by %c242_i32 dim 1 : vector<8x256xf32>, i32 -> vector<8x256xf32>
    %c15 = arith.constant 15 : index
    %c0_20 = arith.constant 0 : index
    %119 = vector.load %arg3[%c15, %c0_20] : memref<25x256xf32, #tpu.memory_space<vmem>>, vector<1x256xf32>
    %120 = vector.broadcast %119 : vector<1x256xf32> to vector<8x256xf32>
    %121 = arith.mulf %118, %120 : vector<8x256xf32>
    %122 = vector.extract_strided_slice %1 {offsets = [0, 15], sizes = [8, 1], strides = [1, 1]} : vector<8x26xf32> to vector<8x1xf32>
    %123 = vector.broadcast %122 : vector<8x1xf32> to vector<8x256xf32>
    %124 = arith.mulf %121, %123 : vector<8x256xf32>
    %125 = arith.addf %117, %124 : vector<8x256xf32>
    %c241_i32 = arith.constant 241 : i32
    %126 = tpu.dynamic_rotate %0 by %c241_i32 dim 1 : vector<8x256xf32>, i32 -> vector<8x256xf32>
    %c16 = arith.constant 16 : index
    %c0_21 = arith.constant 0 : index
    %127 = vector.load %arg3[%c16, %c0_21] : memref<25x256xf32, #tpu.memory_space<vmem>>, vector<1x256xf32>
    %128 = vector.broadcast %127 : vector<1x256xf32> to vector<8x256xf32>
    %129 = arith.mulf %126, %128 : vector<8x256xf32>
    %130 = vector.extract_strided_slice %1 {offsets = [0, 16], sizes = [8, 1], strides = [1, 1]} : vector<8x26xf32> to vector<8x1xf32>
    %131 = vector.broadcast %130 : vector<8x1xf32> to vector<8x256xf32>
    %132 = arith.mulf %129, %131 : vector<8x256xf32>
    %133 = arith.addf %125, %132 : vector<8x256xf32>
    %c240_i32 = arith.constant 240 : i32
    %134 = tpu.dynamic_rotate %0 by %c240_i32 dim 1 : vector<8x256xf32>, i32 -> vector<8x256xf32>
    %c17 = arith.constant 17 : index
    %c0_22 = arith.constant 0 : index
    %135 = vector.load %arg3[%c17, %c0_22] : memref<25x256xf32, #tpu.memory_space<vmem>>, vector<1x256xf32>
    %136 = vector.broadcast %135 : vector<1x256xf32> to vector<8x256xf32>
    %137 = arith.mulf %134, %136 : vector<8x256xf32>
    %138 = vector.extract_strided_slice %1 {offsets = [0, 17], sizes = [8, 1], strides = [1, 1]} : vector<8x26xf32> to vector<8x1xf32>
    %139 = vector.broadcast %138 : vector<8x1xf32> to vector<8x256xf32>
    %140 = arith.mulf %137, %139 : vector<8x256xf32>
    %141 = arith.addf %133, %140 : vector<8x256xf32>
    %c239_i32 = arith.constant 239 : i32
    %142 = tpu.dynamic_rotate %0 by %c239_i32 dim 1 : vector<8x256xf32>, i32 -> vector<8x256xf32>
    %c18 = arith.constant 18 : index
    %c0_23 = arith.constant 0 : index
    %143 = vector.load %arg3[%c18, %c0_23] : memref<25x256xf32, #tpu.memory_space<vmem>>, vector<1x256xf32>
    %144 = vector.broadcast %143 : vector<1x256xf32> to vector<8x256xf32>
    %145 = arith.mulf %142, %144 : vector<8x256xf32>
    %146 = vector.extract_strided_slice %1 {offsets = [0, 18], sizes = [8, 1], strides = [1, 1]} : vector<8x26xf32> to vector<8x1xf32>
    %147 = vector.broadcast %146 : vector<8x1xf32> to vector<8x256xf32>
    %148 = arith.mulf %145, %147 : vector<8x256xf32>
    %149 = arith.addf %141, %148 : vector<8x256xf32>
    %c238_i32 = arith.constant 238 : i32
    %150 = tpu.dynamic_rotate %0 by %c238_i32 dim 1 : vector<8x256xf32>, i32 -> vector<8x256xf32>
    %c19 = arith.constant 19 : index
    %c0_24 = arith.constant 0 : index
    %151 = vector.load %arg3[%c19, %c0_24] : memref<25x256xf32, #tpu.memory_space<vmem>>, vector<1x256xf32>
    %152 = vector.broadcast %151 : vector<1x256xf32> to vector<8x256xf32>
    %153 = arith.mulf %150, %152 : vector<8x256xf32>
    %154 = vector.extract_strided_slice %1 {offsets = [0, 19], sizes = [8, 1], strides = [1, 1]} : vector<8x26xf32> to vector<8x1xf32>
    %155 = vector.broadcast %154 : vector<8x1xf32> to vector<8x256xf32>
    %156 = arith.mulf %153, %155 : vector<8x256xf32>
    %157 = arith.addf %149, %156 : vector<8x256xf32>
    %c226_i32 = arith.constant 226 : i32
    %158 = tpu.dynamic_rotate %0 by %c226_i32 dim 1 : vector<8x256xf32>, i32 -> vector<8x256xf32>
    %c20 = arith.constant 20 : index
    %c0_25 = arith.constant 0 : index
    %159 = vector.load %arg3[%c20, %c0_25] : memref<25x256xf32, #tpu.memory_space<vmem>>, vector<1x256xf32>
    %160 = vector.broadcast %159 : vector<1x256xf32> to vector<8x256xf32>
    %161 = arith.mulf %158, %160 : vector<8x256xf32>
    %162 = vector.extract_strided_slice %1 {offsets = [0, 20], sizes = [8, 1], strides = [1, 1]} : vector<8x26xf32> to vector<8x1xf32>
    %163 = vector.broadcast %162 : vector<8x1xf32> to vector<8x256xf32>
    %164 = arith.mulf %161, %163 : vector<8x256xf32>
    %165 = arith.addf %157, %164 : vector<8x256xf32>
    %c225_i32 = arith.constant 225 : i32
    %166 = tpu.dynamic_rotate %0 by %c225_i32 dim 1 : vector<8x256xf32>, i32 -> vector<8x256xf32>
    %c21 = arith.constant 21 : index
    %c0_26 = arith.constant 0 : index
    %167 = vector.load %arg3[%c21, %c0_26] : memref<25x256xf32, #tpu.memory_space<vmem>>, vector<1x256xf32>
    %168 = vector.broadcast %167 : vector<1x256xf32> to vector<8x256xf32>
    %169 = arith.mulf %166, %168 : vector<8x256xf32>
    %170 = vector.extract_strided_slice %1 {offsets = [0, 21], sizes = [8, 1], strides = [1, 1]} : vector<8x26xf32> to vector<8x1xf32>
    %171 = vector.broadcast %170 : vector<8x1xf32> to vector<8x256xf32>
    %172 = arith.mulf %169, %171 : vector<8x256xf32>
    %173 = arith.addf %165, %172 : vector<8x256xf32>
    %c224_i32 = arith.constant 224 : i32
    %174 = tpu.dynamic_rotate %0 by %c224_i32 dim 1 : vector<8x256xf32>, i32 -> vector<8x256xf32>
    %c22 = arith.constant 22 : index
    %c0_27 = arith.constant 0 : index
    %175 = vector.load %arg3[%c22, %c0_27] : memref<25x256xf32, #tpu.memory_space<vmem>>, vector<1x256xf32>
    %176 = vector.broadcast %175 : vector<1x256xf32> to vector<8x256xf32>
    %177 = arith.mulf %174, %176 : vector<8x256xf32>
    %178 = vector.extract_strided_slice %1 {offsets = [0, 22], sizes = [8, 1], strides = [1, 1]} : vector<8x26xf32> to vector<8x1xf32>
    %179 = vector.broadcast %178 : vector<8x1xf32> to vector<8x256xf32>
    %180 = arith.mulf %177, %179 : vector<8x256xf32>
    %181 = arith.addf %173, %180 : vector<8x256xf32>
    %c223_i32 = arith.constant 223 : i32
    %182 = tpu.dynamic_rotate %0 by %c223_i32 dim 1 : vector<8x256xf32>, i32 -> vector<8x256xf32>
    %c23 = arith.constant 23 : index
    %c0_28 = arith.constant 0 : index
    %183 = vector.load %arg3[%c23, %c0_28] : memref<25x256xf32, #tpu.memory_space<vmem>>, vector<1x256xf32>
    %184 = vector.broadcast %183 : vector<1x256xf32> to vector<8x256xf32>
    %185 = arith.mulf %182, %184 : vector<8x256xf32>
    %186 = vector.extract_strided_slice %1 {offsets = [0, 23], sizes = [8, 1], strides = [1, 1]} : vector<8x26xf32> to vector<8x1xf32>
    %187 = vector.broadcast %186 : vector<8x1xf32> to vector<8x256xf32>
    %188 = arith.mulf %185, %187 : vector<8x256xf32>
    %189 = arith.addf %181, %188 : vector<8x256xf32>
    %c222_i32 = arith.constant 222 : i32
    %190 = tpu.dynamic_rotate %0 by %c222_i32 dim 1 : vector<8x256xf32>, i32 -> vector<8x256xf32>
    %c24 = arith.constant 24 : index
    %c0_29 = arith.constant 0 : index
    %191 = vector.load %arg3[%c24, %c0_29] : memref<25x256xf32, #tpu.memory_space<vmem>>, vector<1x256xf32>
    %192 = vector.broadcast %191 : vector<1x256xf32> to vector<8x256xf32>
    %193 = arith.mulf %190, %192 : vector<8x256xf32>
    %194 = vector.extract_strided_slice %1 {offsets = [0, 24], sizes = [8, 1], strides = [1, 1]} : vector<8x26xf32> to vector<8x1xf32>
    %195 = vector.broadcast %194 : vector<8x1xf32> to vector<8x256xf32>
    %196 = arith.mulf %193, %195 : vector<8x256xf32>
    %197 = arith.addf %189, %196 : vector<8x256xf32>
    %198 = vector.extract_strided_slice %1 {offsets = [0, 25], sizes = [8, 1], strides = [1, 1]} : vector<8x26xf32> to vector<8x1xf32>
    %199 = vector.broadcast %198 : vector<8x1xf32> to vector<8x256xf32>
    %200 = arith.addf %197, %199 : vector<8x256xf32>
    %201 = vector.extract_strided_slice %2 {offsets = [0, 8], sizes = [8, 1], strides = [1, 1]} : vector<8x9xf32> to vector<8x1xf32>
    %202 = vector.broadcast %201 : vector<8x1xf32> to vector<8x256xf32>
    %203 = arith.addf %0, %202 : vector<8x256xf32>
    %204 = vector.extract_strided_slice %2 {offsets = [0, 0], sizes = [8, 1], strides = [1, 1]} : vector<8x9xf32> to vector<8x1xf32>
    %205 = vector.extract_strided_slice %200 {offsets = [0, 0], sizes = [1, 256], strides = [1, 1]} : vector<8x256xf32> to vector<1x256xf32>
    %206 = vector.broadcast %204 : vector<8x1xf32> to vector<8x256xf32>
    %207 = vector.broadcast %205 : vector<1x256xf32> to vector<8x256xf32>
    %208 = arith.mulf %206, %207 : vector<8x256xf32>
    %209 = arith.addf %203, %208 : vector<8x256xf32>
    %210 = vector.extract_strided_slice %2 {offsets = [0, 1], sizes = [8, 1], strides = [1, 1]} : vector<8x9xf32> to vector<8x1xf32>
    %211 = vector.extract_strided_slice %200 {offsets = [1, 0], sizes = [1, 256], strides = [1, 1]} : vector<8x256xf32> to vector<1x256xf32>
    %212 = vector.broadcast %210 : vector<8x1xf32> to vector<8x256xf32>
    %213 = vector.broadcast %211 : vector<1x256xf32> to vector<8x256xf32>
    %214 = arith.mulf %212, %213 : vector<8x256xf32>
    %215 = arith.addf %209, %214 : vector<8x256xf32>
    %216 = vector.extract_strided_slice %2 {offsets = [0, 2], sizes = [8, 1], strides = [1, 1]} : vector<8x9xf32> to vector<8x1xf32>
    %217 = vector.extract_strided_slice %200 {offsets = [2, 0], sizes = [1, 256], strides = [1, 1]} : vector<8x256xf32> to vector<1x256xf32>
    %218 = vector.broadcast %216 : vector<8x1xf32> to vector<8x256xf32>
    %219 = vector.broadcast %217 : vector<1x256xf32> to vector<8x256xf32>
    %220 = arith.mulf %218, %219 : vector<8x256xf32>
    %221 = arith.addf %215, %220 : vector<8x256xf32>
    %222 = vector.extract_strided_slice %2 {offsets = [0, 3], sizes = [8, 1], strides = [1, 1]} : vector<8x9xf32> to vector<8x1xf32>
    %223 = vector.extract_strided_slice %200 {offsets = [3, 0], sizes = [1, 256], strides = [1, 1]} : vector<8x256xf32> to vector<1x256xf32>
    %224 = vector.broadcast %222 : vector<8x1xf32> to vector<8x256xf32>
    %225 = vector.broadcast %223 : vector<1x256xf32> to vector<8x256xf32>
    %226 = arith.mulf %224, %225 : vector<8x256xf32>
    %227 = arith.addf %221, %226 : vector<8x256xf32>
    %228 = vector.extract_strided_slice %2 {offsets = [0, 4], sizes = [8, 1], strides = [1, 1]} : vector<8x9xf32> to vector<8x1xf32>
    %229 = vector.extract_strided_slice %200 {offsets = [4, 0], sizes = [1, 256], strides = [1, 1]} : vector<8x256xf32> to vector<1x256xf32>
    %230 = vector.broadcast %228 : vector<8x1xf32> to vector<8x256xf32>
    %231 = vector.broadcast %229 : vector<1x256xf32> to vector<8x256xf32>
    %232 = arith.mulf %230, %231 : vector<8x256xf32>
    %233 = arith.addf %227, %232 : vector<8x256xf32>
    %234 = vector.extract_strided_slice %2 {offsets = [0, 5], sizes = [8, 1], strides = [1, 1]} : vector<8x9xf32> to vector<8x1xf32>
    %235 = vector.extract_strided_slice %200 {offsets = [5, 0], sizes = [1, 256], strides = [1, 1]} : vector<8x256xf32> to vector<1x256xf32>
    %236 = vector.broadcast %234 : vector<8x1xf32> to vector<8x256xf32>
    %237 = vector.broadcast %235 : vector<1x256xf32> to vector<8x256xf32>
    %238 = arith.mulf %236, %237 : vector<8x256xf32>
    %239 = arith.addf %233, %238 : vector<8x256xf32>
    %240 = vector.extract_strided_slice %2 {offsets = [0, 6], sizes = [8, 1], strides = [1, 1]} : vector<8x9xf32> to vector<8x1xf32>
    %241 = vector.extract_strided_slice %200 {offsets = [6, 0], sizes = [1, 256], strides = [1, 1]} : vector<8x256xf32> to vector<1x256xf32>
    %242 = vector.broadcast %240 : vector<8x1xf32> to vector<8x256xf32>
    %243 = vector.broadcast %241 : vector<1x256xf32> to vector<8x256xf32>
    %244 = arith.mulf %242, %243 : vector<8x256xf32>
    %245 = arith.addf %239, %244 : vector<8x256xf32>
    %246 = vector.extract_strided_slice %2 {offsets = [0, 7], sizes = [8, 1], strides = [1, 1]} : vector<8x9xf32> to vector<8x1xf32>
    %247 = vector.extract_strided_slice %200 {offsets = [7, 0], sizes = [1, 256], strides = [1, 1]} : vector<8x256xf32> to vector<1x256xf32>
    %248 = vector.broadcast %246 : vector<8x1xf32> to vector<8x256xf32>
    %249 = vector.broadcast %247 : vector<1x256xf32> to vector<8x256xf32>
    %250 = arith.mulf %248, %249 : vector<8x256xf32>
    %251 = arith.addf %245, %250 : vector<8x256xf32>
    %252 = math.absf %251 : vector<8x256xf32>
    %cst = arith.constant 0.000000e+00 : f32
    %253 = vector.broadcast %cst : f32 to vector<8x256xf32>
    %254 = arith.subf %253, %252 : vector<8x256xf32>
    %255 = math.exp %254 : vector<8x256xf32>
    %cst_30 = arith.constant 0.000000e+00 : f32
    %256 = vector.broadcast %cst_30 : f32 to vector<8x256xf32>
    %257 = arith.cmpf oge, %251, %256 : vector<8x256xf32>
    %cst_31 = arith.constant 1.000000e+00 : f32
    %258 = vector.broadcast %cst_31 : f32 to vector<8x256xf32>
    %259 = arith.select %257, %258, %255 : vector<8x256xi1>, vector<8x256xf32>
    %260 = arith.mulf %251, %259 : vector<8x256xf32>
    %cst_32 = arith.constant 1.000000e+00 : f32
    %261 = vector.broadcast %cst_32 : f32 to vector<8x256xf32>
    %262 = arith.addf %261, %255 : vector<8x256xf32>
    %263 = arith.divf %260, %262 : vector<8x256xf32>
    %c0_33 = arith.constant 0 : index
    %c0_34 = arith.constant 0 : index
    %264 = vector.load %arg4[%c0_33, %c0_34] : memref<8x256xf32, #tpu.memory_space<vmem>>, vector<8x256xf32>
    tpu.vector_store %arg4[%c0_33, %c0_34], %263 {strides = array<i32>} : memref<8x256xf32, #tpu.memory_space<vmem>>, vector<8x256xf32>,
    return
  }
}

</mosaic_0001>

<llo_original>
// kernel: tpu_custom_call.1
$region0: #{tpu_custom_call.1}
  #allocation0 [shape = 'u32[]', space=smem, size = 0x4, offset = 0x4, fixed_abs, tag = 'smem constant byte address 0x4 - core index']
  #allocation1 [shape = 'u32[72,128]{1,0:T(1,128)}', space=vmem, size = 0x9000, scoped, tag = 'internal scratch']
  %s0 = inlined_call_operand.hbm [shape: f32[8,256], index: 0, kind: input, shape index: {}]
  %s1 = inlined_call_operand.hbm [shape: f32[8,26], index: 1, kind: input, shape index: {}]
  %s2 = inlined_call_operand.hbm [shape: f32[8,9], index: 2, kind: input, shape index: {}]
  %s3 = inlined_call_operand.hbm [shape: f32[25,256], index: 3, kind: input, shape index: {}]
  %s4 = inlined_call_operand.hbm [shape: f32[8,256], index: 4, kind: output, shape index: {}]
  %s5 = sld [smem:[#allocation0]]
  $region42: #{tpu_custom_call.1} parent=0
    _
  %s7 = ssub.s32 1, %s5
  %s8 = scalar_select 0, %s7, %s5
  $region1: #{tpu_custom_call.1} parent=0
    #allocation2 [shape = 'u8[8192]{0}', space=vmem, size = 0x2000, scoped, tag = 'input window, operand 0, single buffered']
    #allocation3 [shape = 's32[1]{0}', space=sflag, size = 0x4, scoped, tag = 'scoped memory for tpu_custom_call.1']
    #allocation4 [shape = 's32[1]{0}', space=sflag, size = 0x4, scoped, tag = 'scoped memory for tpu_custom_call.1']
    #allocation5 [shape = 'u8[4096]{0}', space=vmem, size = 0x1000, scoped, tag = 'input window, operand 1, single buffered']
    #allocation6 [shape = 's32[1]{0}', space=sflag, size = 0x4, scoped, tag = 'scoped memory for tpu_custom_call.1']
    #allocation7 [shape = 'u8[4096]{0}', space=vmem, size = 0x1000, scoped, tag = 'input window, operand 2, single buffered']
    #allocation8 [shape = 'u8[32768]{0}', space=vmem, size = 0x8000, scoped, tag = 'input window, operand 3, single buffered']
    #allocation9 [shape = 's32[1]{0}', space=sflag, size = 0x4, scoped, tag = 'scoped memory for tpu_custom_call.1']
    #allocation10 [shape = 'u8[8192]{0}', space=vmem, size = 0x2000, scoped, tag = 'output window, operand 0, single buffered']
    %9 = vsyncpa [#allocation3], 0
    %10 = vsyncpa [#allocation6], 0
    %11 = vsyncpa [#allocation9], 0
    %12 = vsyncpa [#allocation4], 0
    // Predicated region
    $region2: #{tpu_custom_call.1} parent=1 // pred_check
      _
    $region3: #{tpu_custom_call.1} parent=1 // pred_check_branch
      %14 = sbr.rel (0) target = $region5
    $region4: #{tpu_custom_call.1} parent=1 // pred_region
      %16 = vsyncadd [#allocation3], 0
      %s18 = sshll.u32 %s0, 4
      %s19 = int_to_ptr.hbm [resolvable:$true] %s18
      %s20 = sshll.u32 [#allocation2], 4
      %s21 = int_to_ptr.vmem [resolvable:$true] %s20
      %23 = dma.hbm_to_vmem [thread:$0]  %s19, 256, %s21, [#allocation3]
    $region5: #{tpu_custom_call.1} parent=1 // pred_fallthru
      _
    // Predicated region
    $region6: #{tpu_custom_call.1} parent=1 // pred_check
      _
    $region7: #{tpu_custom_call.1} parent=1 // pred_check_branch
      %25 = sbr.rel (0) target = $region9
    $region8: #{tpu_custom_call.1} parent=1 // pred_region
      %27 = vsyncadd [#allocation6], 0
      %s29 = sshll.u32 %s1, 4
      %s30 = int_to_ptr.hbm [resolvable:$true] %s29
      %s31 = sshll.u32 [#allocation5], 4
      %s32 = int_to_ptr.vmem [resolvable:$true] %s31
      %34 = dma.hbm_to_vmem [thread:$0]  %s30, 128, %s32, [#allocation6]
    $region9: #{tpu_custom_call.1} parent=1 // pred_fallthru
      _
    // Predicated region
    $region10: #{tpu_custom_call.1} parent=1 // pred_check
      _
    $region11: #{tpu_custom_call.1} parent=1 // pred_check_branch
      %36 = sbr.rel (0) target = $region13
    $region12: #{tpu_custom_call.1} parent=1 // pred_region
      %38 = vsyncadd [#allocation6], 0
      %s40 = sshll.u32 %s2, 4
      %s41 = int_to_ptr.hbm [resolvable:$true] %s40
      %s42 = sshll.u32 [#allocation7], 4
      %s43 = int_to_ptr.vmem [resolvable:$true] %s42
      %45 = dma.hbm_to_vmem [thread:$0]  %s41, 128, %s43, [#allocation6]
    $region13: #{tpu_custom_call.1} parent=1 // pred_fallthru
      _
    // Predicated region
    $region14: #{tpu_custom_call.1} parent=1 // pred_check
      _
    $region15: #{tpu_custom_call.1} parent=1 // pred_check_branch
      %47 = sbr.rel (0) target = $region17
    $region16: #{tpu_custom_call.1} parent=1 // pred_region
      %49 = vsyncadd [#allocation9], 0
      %s50 = sshll.u32 %s3, 4
      %s51 = int_to_ptr.hbm [resolvable:$true] %s50
      %s52 = sshll.u32 [#allocation8], 4
      %s53 = int_to_ptr.vmem [resolvable:$true] %s52
      %58 = dma.hbm_to_vmem [thread:$0]  %s51, 1024, %s53, [#allocation9], 256, 256, 16
    $region17: #{tpu_custom_call.1} parent=1 // pred_fallthru
      _
    // Predicated region
    $region18: #{tpu_custom_call.1} parent=1 // pred_check
      _
    $region19: #{tpu_custom_call.1} parent=1 // pred_check_branch
      %60 = sbr.rel (0) target = $region21
    $region20: #{tpu_custom_call.1} parent=1 // pred_region
      %62 = dma.done [#allocation3], 256
    $region21: #{tpu_custom_call.1} parent=1 // pred_fallthru
      _
    // Predicated region
    $region22: #{tpu_custom_call.1} parent=1 // pred_check
      _
    $region23: #{tpu_custom_call.1} parent=1 // pred_check_branch
      %64 = sbr.rel (0) target = $region25
    $region24: #{tpu_custom_call.1} parent=1 // pred_region
      %66 = dma.done [#allocation6], 128
    $region25: #{tpu_custom_call.1} parent=1 // pred_fallthru
      _
    // Predicated region
    $region26: #{tpu_custom_call.1} parent=1 // pred_check
      _
    $region27: #{tpu_custom_call.1} parent=1 // pred_check_branch
      %68 = sbr.rel (0) target = $region29
    $region28: #{tpu_custom_call.1} parent=1 // pred_region
      %70 = dma.done [#allocation6], 128
    $region29: #{tpu_custom_call.1} parent=1 // pred_fallthru
      _
    // Predicated region
    $region30: #{tpu_custom_call.1} parent=1 // pred_check
      _
    $region31: #{tpu_custom_call.1} parent=1 // pred_check_branch
      %72 = sbr.rel (0) target = $region33
    $region32: #{tpu_custom_call.1} parent=1 // pred_region
      %74 = dma.done [#allocation9], 1024
    $region33: #{tpu_custom_call.1} parent=1 // pred_fallthru
      _
    %v75 = vld [vmem:[#allocation2] sm:$0xff]
    %v76 = vld [vmem:[#allocation2 + $0x8] sm:$0xff]
    %v77 = vld [vmem:[#allocation5] sm:$0xff]
    %v78 = vld [vmem:[#allocation7] sm:$0xff]
    %80 = vset.pattern.permute.xlu0 12
    %81 = vperm.xlu0 %80, %v77
    %v82 = vpop.permute.xlu0 %81
    %v84 = vmul.f32 %v75, %v82
    %v85 = vmul.f32 %v76, %v82
    %86 = vrot.lane.b32.xlu0 %v75, 34
    %v87 = vpop.permute.xlu0 %86
    %88 = vrot.lane.b32.xlu0 %v76, 34
    %v89 = vpop.permute.xlu0 %88
    %v90 = vlaneseq
    %v91 = vand.u32 %v90, 127
    %vm92 = vcmp.lt.s32.totalorder %v91, 34
    %v93 = vsel %vm92, %v87, %v89
    %v94 = vsel %vm92, %v89, %v87
    %v95 = vld [vmem:[#allocation8] ss:$8 sm:$0x3]
    %v97 = vperm.slane %v95, 0
    %v98 = vperm.slane %v95, 1
    %v101 = vmul.f32 %v94, %v97
    %v102 = vmul.f32 %v93, %v98
    %103 = vset.pattern.permute.xlu0 0
    %104 = vperm.xlu0 %103, %v77
    %v105 = vpop.permute.xlu0 %104
    %v107 = vmul.f32 %v101, %v105
    %v108 = vmul.f32 %v102, %v105
    %v109 = vadd.f32 %v84, %v107
    %v110 = vadd.f32 %v85, %v108
    %111 = vrot.lane.b32.xlu0 %v75, 33
    %v112 = vpop.permute.xlu0 %111
    %113 = vrot.lane.b32.xlu0 %v76, 33
    %v114 = vpop.permute.xlu0 %113
    %vm115 = vcmp.lt.s32.totalorder %v91, 33
    %v116 = vsel %vm115, %v112, %v114
    %v117 = vsel %vm115, %v114, %v112
    %s118 = scalar_lea.vmem [#allocation8], 1
    %v119 = vld [vmem:[%s118] ss:$8 sm:$0x3]
    %v121 = vperm.slane %v119, 0
    %v122 = vperm.slane %v119, 1
    %v125 = vmul.f32 %v117, %v121
    %v126 = vmul.f32 %v116, %v122
    %127 = vset.pattern.permute.xlu0 1
    %128 = vperm.xlu0 %127, %v77
    %v129 = vpop.permute.xlu0 %128
    %v131 = vmul.f32 %v125, %v129
    %v132 = vmul.f32 %v126, %v129
    %v133 = vadd.f32 %v109, %v131
    %v134 = vadd.f32 %v110, %v132
    %135 = vrot.lane.b32.xlu0 %v75, 32
    %v136 = vpop.permute.xlu0 %135
    %137 = vrot.lane.b32.xlu0 %v76, 32
    %v138 = vpop.permute.xlu0 %137
    %vm139 = vcmp.lt.s32.totalorder %v91, 32
    %v140 = vsel %vm139, %v136, %v138
    %v141 = vsel %vm139, %v138, %v136
    %s142 = scalar_lea.vmem [#allocation8], 2
    %v143 = vld [vmem:[%s142] ss:$8 sm:$0x3]
    %v145 = vperm.slane %v143, 0
    %v146 = vperm.slane %v143, 1
    %v149 = vmul.f32 %v141, %v145
    %v150 = vmul.f32 %v140, %v146
    %151 = vset.pattern.permute.xlu0 2
    %152 = vperm.xlu0 %151, %v77
    %v153 = vpop.permute.xlu0 %152
    %v155 = vmul.f32 %v149, %v153
    %v156 = vmul.f32 %v150, %v153
    %v157 = vadd.f32 %v133, %v155
    %v158 = vadd.f32 %v134, %v156
    %159 = vrot.lane.b32.xlu0 %v75, 31
    %v160 = vpop.permute.xlu0 %159
    %161 = vrot.lane.b32.xlu0 %v76, 31
    %v162 = vpop.permute.xlu0 %161
    %vm163 = vcmp.lt.s32.totalorder %v91, 31
    %v164 = vsel %vm163, %v160, %v162
    %v165 = vsel %vm163, %v162, %v160
    %s166 = scalar_lea.vmem [#allocation8], 3
    %v167 = vld [vmem:[%s166] ss:$8 sm:$0x3]
    %v169 = vperm.slane %v167, 0
    %v170 = vperm.slane %v167, 1
    %v173 = vmul.f32 %v165, %v169
    %v174 = vmul.f32 %v164, %v170
    %175 = vset.pattern.permute.xlu0 3
    %176 = vperm.xlu0 %175, %v77
    %v177 = vpop.permute.xlu0 %176
    %v179 = vmul.f32 %v173, %v177
    %v180 = vmul.f32 %v174, %v177
    %v181 = vadd.f32 %v157, %v179
    %v182 = vadd.f32 %v158, %v180
    %183 = vrot.lane.b32.xlu0 %v75, 30
    %v184 = vpop.permute.xlu0 %183
    %185 = vrot.lane.b32.xlu0 %v76, 30
    %v186 = vpop.permute.xlu0 %185
    %vm187 = vcmp.lt.s32.totalorder %v91, 30
    %v188 = vsel %vm187, %v184, %v186
    %v189 = vsel %vm187, %v186, %v184
    %s190 = scalar_lea.vmem [#allocation8], 4
    %v191 = vld [vmem:[%s190] ss:$8 sm:$0x3]
    %v193 = vperm.slane %v191, 0
    %v194 = vperm.slane %v191, 1
    %v197 = vmul.f32 %v189, %v193
    %v198 = vmul.f32 %v188, %v194
    %199 = vset.pattern.permute.xlu0 4
    %200 = vperm.xlu0 %199, %v77
    %v201 = vpop.permute.xlu0 %200
    %v203 = vmul.f32 %v197, %v201
    %v204 = vmul.f32 %v198, %v201
    %v205 = vadd.f32 %v181, %v203
    %v206 = vadd.f32 %v182, %v204
    %207 = vrot.lane.b32.xlu0 %v75, 18
    %v208 = vpop.permute.xlu0 %207
    %209 = vrot.lane.b32.xlu0 %v76, 18
    %v210 = vpop.permute.xlu0 %209
    %vm211 = vcmp.lt.s32.totalorder %v91, 18
    %v212 = vsel %vm211, %v208, %v210
    %v213 = vsel %vm211, %v210, %v208
    %s214 = scalar_lea.vmem [#allocation8], 5
    %v215 = vld [vmem:[%s214] ss:$8 sm:$0x3]
    %v217 = vperm.slane %v215, 0
    %v218 = vperm.slane %v215, 1
    %v221 = vmul.f32 %v213, %v217
    %v222 = vmul.f32 %v212, %v218
    %223 = vset.pattern.permute.xlu0 5
    %224 = vperm.xlu0 %223, %v77
    %v225 = vpop.permute.xlu0 %224
    %v227 = vmul.f32 %v221, %v225
    %v228 = vmul.f32 %v222, %v225
    %v229 = vadd.f32 %v205, %v227
    %v230 = vadd.f32 %v206, %v228
    %231 = vrot.lane.b32.xlu0 %v75, 17
    %v232 = vpop.permute.xlu0 %231
    %233 = vrot.lane.b32.xlu0 %v76, 17
    %v234 = vpop.permute.xlu0 %233
    %vm235 = vcmp.lt.s32.totalorder %v91, 17
    %v236 = vsel %vm235, %v232, %v234
    %v237 = vsel %vm235, %v234, %v232
    %s238 = scalar_lea.vmem [#allocation8], 6
    %v239 = vld [vmem:[%s238] ss:$8 sm:$0x3]
    %v241 = vperm.slane %v239, 0
    %v242 = vperm.slane %v239, 1
    %v245 = vmul.f32 %v237, %v241
    %v246 = vmul.f32 %v236, %v242
    %247 = vset.pattern.permute.xlu0 6
    %248 = vperm.xlu0 %247, %v77
    %v249 = vpop.permute.xlu0 %248
    %v251 = vmul.f32 %v245, %v249
    %v252 = vmul.f32 %v246, %v249
    %v253 = vadd.f32 %v229, %v251
    %v254 = vadd.f32 %v230, %v252
    %255 = vrot.lane.b32.xlu0 %v75, 16
    %v256 = vpop.permute.xlu0 %255
    %257 = vrot.lane.b32.xlu0 %v76, 16
    %v258 = vpop.permute.xlu0 %257
    %vm259 = vcmp.lt.s32.totalorder %v91, 16
    %v260 = vsel %vm259, %v256, %v258
    %v261 = vsel %vm259, %v258, %v256
    %s262 = scalar_lea.vmem [#allocation8], 7
    %v263 = vld [vmem:[%s262] ss:$8 sm:$0x3]
    %v265 = vperm.slane %v263, 0
    %v266 = vperm.slane %v263, 1
    %v269 = vmul.f32 %v261, %v265
    %v270 = vmul.f32 %v260, %v266
    %271 = vset.pattern.permute.xlu0 7
    %272 = vperm.xlu0 %271, %v77
    %v273 = vpop.permute.xlu0 %272
    %v275 = vmul.f32 %v269, %v273
    %v276 = vmul.f32 %v270, %v273
    %v277 = vadd.f32 %v253, %v275
    %v278 = vadd.f32 %v254, %v276
    %279 = vrot.lane.b32.xlu0 %v75, 15
    %v280 = vpop.permute.xlu0 %279
    %281 = vrot.lane.b32.xlu0 %v76, 15
    %v282 = vpop.permute.xlu0 %281
    %vm283 = vcmp.lt.s32.totalorder %v91, 15
    %v284 = vsel %vm283, %v280, %v282
    %v285 = vsel %vm283, %v282, %v280
    %s286 = scalar_lea.vmem [#allocation8], 16
    %v287 = vld [vmem:[%s286] ss:$8 sm:$0x3]
    %v289 = vperm.slane %v287, 0
    %v290 = vperm.slane %v287, 1
    %v293 = vmul.f32 %v285, %v289
    %v294 = vmul.f32 %v284, %v290
    %295 = vset.pattern.permute.xlu0 8
    %296 = vperm.xlu0 %295, %v77
    %v297 = vpop.permute.xlu0 %296
    %v299 = vmul.f32 %v293, %v297
    %v300 = vmul.f32 %v294, %v297
    %v301 = vadd.f32 %v277, %v299
    %v302 = vadd.f32 %v278, %v300
    %303 = vrot.lane.b32.xlu0 %v75, 14
    %v304 = vpop.permute.xlu0 %303
    %305 = vrot.lane.b32.xlu0 %v76, 14
    %v306 = vpop.permute.xlu0 %305
    %vm307 = vcmp.lt.s32.totalorder %v91, 14
    %v308 = vsel %vm307, %v304, %v306
    %v309 = vsel %vm307, %v306, %v304
    %s310 = scalar_lea.vmem [#allocation8], 17
    %v311 = vld [vmem:[%s310] ss:$8 sm:$0x3]
    %v313 = vperm.slane %v311, 0
    %v314 = vperm.slane %v311, 1
    %v317 = vmul.f32 %v309, %v313
    %v318 = vmul.f32 %v308, %v314
    %319 = vset.pattern.permute.xlu0 9
    %320 = vperm.xlu0 %319, %v77
    %v321 = vpop.permute.xlu0 %320
    %v323 = vmul.f32 %v317, %v321
    %v324 = vmul.f32 %v318, %v321
    %v325 = vadd.f32 %v301, %v323
    %v326 = vadd.f32 %v302, %v324
    %327 = vrot.lane.b32.xlu0 %v75, 2
    %v328 = vpop.permute.xlu0 %327
    %329 = vrot.lane.b32.xlu0 %v76, 2
    %v330 = vpop.permute.xlu0 %329
    %vm331 = vcmp.lt.s32.totalorder %v91, 2
    %v332 = vsel %vm331, %v328, %v330
    %v333 = vsel %vm331, %v330, %v328
    %s334 = scalar_lea.vmem [#allocation8], 18
    %v335 = vld [vmem:[%s334] ss:$8 sm:$0x3]
    %v337 = vperm.slane %v335, 0
    %v338 = vperm.slane %v335, 1
    %v341 = vmul.f32 %v333, %v337
    %v342 = vmul.f32 %v332, %v338
    %343 = vset.pattern.permute.xlu0 10
    %344 = vperm.xlu0 %343, %v77
    %v345 = vpop.permute.xlu0 %344
    %v347 = vmul.f32 %v341, %v345
    %v348 = vmul.f32 %v342, %v345
    %v349 = vadd.f32 %v325, %v347
    %v350 = vadd.f32 %v326, %v348
    %351 = vrot.lane.b32.xlu0 %v75, 1
    %v352 = vpop.permute.xlu0 %351
    %353 = vrot.lane.b32.xlu0 %v76, 1
    %v354 = vpop.permute.xlu0 %353
    %vm355 = vcmp.lt.s32.totalorder %v91, 1
    %v356 = vsel %vm355, %v352, %v354
    %v357 = vsel %vm355, %v354, %v352
    %s358 = scalar_lea.vmem [#allocation8], 19
    %v359 = vld [vmem:[%s358] ss:$8 sm:$0x3]
    %v361 = vperm.slane %v359, 0
    %v362 = vperm.slane %v359, 1
    %v365 = vmul.f32 %v357, %v361
    %v366 = vmul.f32 %v356, %v362
    %367 = vset.pattern.permute.xlu0 11
    %368 = vperm.xlu0 %367, %v77
    %v369 = vpop.permute.xlu0 %368
    %v371 = vmul.f32 %v365, %v369
    %v372 = vmul.f32 %v366, %v369
    %v373 = vadd.f32 %v349, %v371
    %v374 = vadd.f32 %v350, %v372
    %375 = vrot.lane.b32.xlu0 %v75, 127
    %v376 = vpop.permute.xlu0 %375
    %377 = vrot.lane.b32.xlu0 %v76, 127
    %v378 = vpop.permute.xlu0 %377
    %vm379 = vcmp.lt.s32.totalorder %v91, 127
    %v380 = vsel %vm379, %v376, %v378
    %v381 = vsel %vm379, %v378, %v376
    %s382 = scalar_lea.vmem [#allocation8], 21
    %v383 = vld [vmem:[%s382] ss:$8 sm:$0x3]
    %v385 = vperm.slane %v383, 0
    %v386 = vperm.slane %v383, 1
    %v389 = vmul.f32 %v380, %v385
    %v390 = vmul.f32 %v381, %v386
    %391 = vset.pattern.permute.xlu0 13
    %392 = vperm.xlu0 %391, %v77
    %v393 = vpop.permute.xlu0 %392
    %v395 = vmul.f32 %v389, %v393
    %v396 = vmul.f32 %v390, %v393
    %v397 = vadd.f32 %v373, %v395
    %v398 = vadd.f32 %v374, %v396
    %399 = vrot.lane.b32.xlu0 %v75, 126
    %v400 = vpop.permute.xlu0 %399
    %401 = vrot.lane.b32.xlu0 %v76, 126
    %v402 = vpop.permute.xlu0 %401
    %vm403 = vcmp.lt.s32.totalorder %v91, 126
    %v404 = vsel %vm403, %v400, %v402
    %v405 = vsel %vm403, %v402, %v400
    %s406 = scalar_lea.vmem [#allocation8], 22
    %v407 = vld [vmem:[%s406] ss:$8 sm:$0x3]
    %v409 = vperm.slane %v407, 0
    %v410 = vperm.slane %v407, 1
    %v413 = vmul.f32 %v404, %v409
    %v414 = vmul.f32 %v405, %v410
    %415 = vset.pattern.permute.xlu0 14
    %416 = vperm.xlu0 %415, %v77
    %v417 = vpop.permute.xlu0 %416
    %v419 = vmul.f32 %v413, %v417
    %v420 = vmul.f32 %v414, %v417
    %v421 = vadd.f32 %v397, %v419
    %v422 = vadd.f32 %v398, %v420
    %423 = vrot.lane.b32.xlu0 %v75, 114
    %v424 = vpop.permute.xlu0 %423
    %425 = vrot.lane.b32.xlu0 %v76, 114
    %v426 = vpop.permute.xlu0 %425
    %vm427 = vcmp.lt.s32.totalorder %v91, 114
    %v428 = vsel %vm427, %v424, %v426
    %v429 = vsel %vm427, %v426, %v424
    %s430 = scalar_lea.vmem [#allocation8], 23
    %v431 = vld [vmem:[%s430] ss:$8 sm:$0x3]
    %v433 = vperm.slane %v431, 0
    %v434 = vperm.slane %v431, 1
    %v437 = vmul.f32 %v428, %v433
    %v438 = vmul.f32 %v429, %v434
    %439 = vset.pattern.permute.xlu0 15
    %440 = vperm.xlu0 %439, %v77
    %v441 = vpop.permute.xlu0 %440
    %v443 = vmul.f32 %v437, %v441
    %v444 = vmul.f32 %v438, %v441
    %v445 = vadd.f32 %v421, %v443
    %v446 = vadd.f32 %v422, %v444
    %447 = vrot.lane.b32.xlu0 %v75, 113
    %v448 = vpop.permute.xlu0 %447
    %449 = vrot.lane.b32.xlu0 %v76, 113
    %v450 = vpop.permute.xlu0 %449
    %vm451 = vcmp.lt.s32.totalorder %v91, 113
    %v452 = vsel %vm451, %v448, %v450
    %v453 = vsel %vm451, %v450, %v448
    %s454 = scalar_lea.vmem [#allocation8], 32
    %v455 = vld [vmem:[%s454] ss:$8 sm:$0x3]
    %v457 = vperm.slane %v455, 0
    %v458 = vperm.slane %v455, 1
    %v461 = vmul.f32 %v452, %v457
    %v462 = vmul.f32 %v453, %v458
    %463 = vset.pattern.permute.xlu0 16
    %464 = vperm.xlu0 %463, %v77
    %v465 = vpop.permute.xlu0 %464
    %v467 = vmul.f32 %v461, %v465
    %v468 = vmul.f32 %v462, %v465
    %v469 = vadd.f32 %v445, %v467
    %v470 = vadd.f32 %v446, %v468
    %471 = vrot.lane.b32.xlu0 %v75, 112
    %v472 = vpop.permute.xlu0 %471
    %473 = vrot.lane.b32.xlu0 %v76, 112
    %v474 = vpop.permute.xlu0 %473
    %vm475 = vcmp.lt.s32.totalorder %v91, 112
    %v476 = vsel %vm475, %v472, %v474
    %v477 = vsel %vm475, %v474, %v472
    %s478 = scalar_lea.vmem [#allocation8], 33
    %v479 = vld [vmem:[%s478] ss:$8 sm:$0x3]
    %v481 = vperm.slane %v479, 0
    %v482 = vperm.slane %v479, 1
    %v485 = vmul.f32 %v476, %v481
    %v486 = vmul.f32 %v477, %v482
    %487 = vset.pattern.permute.xlu0 17
    %488 = vperm.xlu0 %487, %v77
    %v489 = vpop.permute.xlu0 %488
    %v491 = vmul.f32 %v485, %v489
    %v492 = vmul.f32 %v486, %v489
    %v493 = vadd.f32 %v469, %v491
    %v494 = vadd.f32 %v470, %v492
    %495 = vrot.lane.b32.xlu0 %v75, 111
    %v496 = vpop.permute.xlu0 %495
    %497 = vrot.lane.b32.xlu0 %v76, 111
    %v498 = vpop.permute.xlu0 %497
    %vm499 = vcmp.lt.s32.totalorder %v91, 111
    %v500 = vsel %vm499, %v496, %v498
    %v501 = vsel %vm499, %v498, %v496
    %s502 = scalar_lea.vmem [#allocation8], 34
    %v503 = vld [vmem:[%s502] ss:$8 sm:$0x3]
    %v505 = vperm.slane %v503, 0
    %v506 = vperm.slane %v503, 1
    %v509 = vmul.f32 %v500, %v505
    %v510 = vmul.f32 %v501, %v506
    %511 = vset.pattern.permute.xlu0 18
    %512 = vperm.xlu0 %511, %v77
    %v513 = vpop.permute.xlu0 %512
    %v515 = vmul.f32 %v509, %v513
    %v516 = vmul.f32 %v510, %v513
    %v517 = vadd.f32 %v493, %v515
    %v518 = vadd.f32 %v494, %v516
    %519 = vrot.lane.b32.xlu0 %v75, 110
    %v520 = vpop.permute.xlu0 %519
    %521 = vrot.lane.b32.xlu0 %v76, 110
    %v522 = vpop.permute.xlu0 %521
    %vm523 = vcmp.lt.s32.totalorder %v91, 110
    %v524 = vsel %vm523, %v520, %v522
    %v525 = vsel %vm523, %v522, %v520
    %s526 = scalar_lea.vmem [#allocation8], 35
    %v527 = vld [vmem:[%s526] ss:$8 sm:$0x3]
    %v529 = vperm.slane %v527, 0
    %v530 = vperm.slane %v527, 1
    %v533 = vmul.f32 %v524, %v529
    %v534 = vmul.f32 %v525, %v530
    %535 = vset.pattern.permute.xlu0 19
    %536 = vperm.xlu0 %535, %v77
    %v537 = vpop.permute.xlu0 %536
    %v539 = vmul.f32 %v533, %v537
    %v540 = vmul.f32 %v534, %v537
    %v541 = vadd.f32 %v517, %v539
    %v542 = vadd.f32 %v518, %v540
    %543 = vrot.lane.b32.xlu0 %v75, 98
    %v544 = vpop.permute.xlu0 %543
    %545 = vrot.lane.b32.xlu0 %v76, 98
    %v546 = vpop.permute.xlu0 %545
    %vm547 = vcmp.lt.s32.totalorder %v91, 98
    %v548 = vsel %vm547, %v544, %v546
    %v549 = vsel %vm547, %v546, %v544
    %s550 = scalar_lea.vmem [#allocation8], 36
    %v551 = vld [vmem:[%s550] ss:$8 sm:$0x3]
    %v553 = vperm.slane %v551, 0
    %v554 = vperm.slane %v551, 1
    %v557 = vmul.f32 %v548, %v553
    %v558 = vmul.f32 %v549, %v554
    %559 = vset.pattern.permute.xlu0 20
    %560 = vperm.xlu0 %559, %v77
    %v561 = vpop.permute.xlu0 %560
    %v563 = vmul.f32 %v557, %v561
    %v564 = vmul.f32 %v558, %v561
    %v565 = vadd.f32 %v541, %v563
    %v566 = vadd.f32 %v542, %v564
    %567 = vrot.lane.b32.xlu0 %v75, 97
    %v568 = vpop.permute.xlu0 %567
    %569 = vrot.lane.b32.xlu0 %v76, 97
    %v570 = vpop.permute.xlu0 %569
    %vm571 = vcmp.lt.s32.totalorder %v91, 97
    %v572 = vsel %vm571, %v568, %v570
    %v573 = vsel %vm571, %v570, %v568
    %s574 = scalar_lea.vmem [#allocation8], 37
    %v575 = vld [vmem:[%s574] ss:$8 sm:$0x3]
    %v577 = vperm.slane %v575, 0
    %v578 = vperm.slane %v575, 1
    %v581 = vmul.f32 %v572, %v577
    %v582 = vmul.f32 %v573, %v578
    %583 = vset.pattern.permute.xlu0 21
    %584 = vperm.xlu0 %583, %v77
    %v585 = vpop.permute.xlu0 %584
    %v587 = vmul.f32 %v581, %v585
    %v588 = vmul.f32 %v582, %v585
    %v589 = vadd.f32 %v565, %v587
    %v590 = vadd.f32 %v566, %v588
    %591 = vrot.lane.b32.xlu0 %v75, 96
    %v592 = vpop.permute.xlu0 %591
    %593 = vrot.lane.b32.xlu0 %v76, 96
    %v594 = vpop.permute.xlu0 %593
    %vm595 = vcmp.lt.s32.totalorder %v91, 96
    %v596 = vsel %vm595, %v592, %v594
    %v597 = vsel %vm595, %v594, %v592
    %s598 = scalar_lea.vmem [#allocation8], 38
    %v599 = vld [vmem:[%s598] ss:$8 sm:$0x3]
    %v601 = vperm.slane %v599, 0
    %v602 = vperm.slane %v599, 1
    %v605 = vmul.f32 %v596, %v601
    %v606 = vmul.f32 %v597, %v602
    %607 = vset.pattern.permute.xlu0 22
    %608 = vperm.xlu0 %607, %v77
    %v609 = vpop.permute.xlu0 %608
    %v611 = vmul.f32 %v605, %v609
    %v612 = vmul.f32 %v606, %v609
    %v613 = vadd.f32 %v589, %v611
    %v614 = vadd.f32 %v590, %v612
    %615 = vrot.lane.b32.xlu0 %v75, 95
    %v616 = vpop.permute.xlu0 %615
    %617 = vrot.lane.b32.xlu0 %v76, 95
    %v618 = vpop.permute.xlu0 %617
    %vm619 = vcmp.lt.s32.totalorder %v91, 95
    %v620 = vsel %vm619, %v616, %v618
    %v621 = vsel %vm619, %v618, %v616
    %s622 = scalar_lea.vmem [#allocation8], 39
    %v623 = vld [vmem:[%s622] ss:$8 sm:$0x3]
    %v625 = vperm.slane %v623, 0
    %v626 = vperm.slane %v623, 1
    %v629 = vmul.f32 %v620, %v625
    %v630 = vmul.f32 %v621, %v626
    %631 = vset.pattern.permute.xlu0 23
    %632 = vperm.xlu0 %631, %v77
    %v633 = vpop.permute.xlu0 %632
    %v635 = vmul.f32 %v629, %v633
    %v636 = vmul.f32 %v630, %v633
    %v637 = vadd.f32 %v613, %v635
    %v638 = vadd.f32 %v614, %v636
    %639 = vrot.lane.b32.xlu0 %v75, 94
    %v640 = vpop.permute.xlu0 %639
    %641 = vrot.lane.b32.xlu0 %v76, 94
    %v642 = vpop.permute.xlu0 %641
    %vm643 = vcmp.lt.s32.totalorder %v91, 94
    %v644 = vsel %vm643, %v640, %v642
    %v645 = vsel %vm643, %v642, %v640
    %s646 = scalar_lea.vmem [#allocation8], 48
    %v647 = vld [vmem:[%s646] ss:$8 sm:$0x3]
    %v649 = vperm.slane %v647, 0
    %v650 = vperm.slane %v647, 1
    %v653 = vmul.f32 %v644, %v649
    %v654 = vmul.f32 %v645, %v650
    %655 = vset.pattern.permute.xlu0 24
    %656 = vperm.xlu0 %655, %v77
    %v657 = vpop.permute.xlu0 %656
    %v659 = vmul.f32 %v653, %v657
    %v660 = vmul.f32 %v654, %v657
    %v661 = vadd.f32 %v637, %v659
    %v662 = vadd.f32 %v638, %v660
    %663 = vset.pattern.permute.xlu0 25
    %664 = vperm.xlu0 %663, %v77
    %v665 = vpop.permute.xlu0 %664
    %v667 = vadd.f32 %v661, %v665
    %v668 = vadd.f32 %v662, %v665
    %670 = vset.pattern.permute.xlu0 8
    %671 = vperm.xlu0 %670, %v78
    %v672 = vpop.permute.xlu0 %671
    %v674 = vadd.f32 %v75, %v672
    %v675 = vadd.f32 %v76, %v672
    %676 = vset.pattern.permute.xlu0 0
    %677 = vperm.xlu0 %676, %v78
    %v678 = vpop.permute.xlu0 %677
    %v680 = vperm.slane %v667, 0
    %v681 = vperm.slane %v668, 0
    %v682 = vmul.f32 %v678, %v680
    %v683 = vmul.f32 %v678, %v681
    %v684 = vadd.f32 %v674, %v682
    %v685 = vadd.f32 %v675, %v683
    %686 = vset.pattern.permute.xlu0 1
    %687 = vperm.xlu0 %686, %v78
    %v688 = vpop.permute.xlu0 %687
    %v690 = vperm.slane %v667, 1
    %v691 = vperm.slane %v668, 1
    %v692 = vmul.f32 %v688, %v690
    %v693 = vmul.f32 %v688, %v691
    %v694 = vadd.f32 %v684, %v692
    %v695 = vadd.f32 %v685, %v693
    %696 = vset.pattern.permute.xlu0 2
    %697 = vperm.xlu0 %696, %v78
    %v698 = vpop.permute.xlu0 %697
    %v700 = vperm.slane %v667, 2
    %v701 = vperm.slane %v668, 2
    %v702 = vmul.f32 %v698, %v700
    %v703 = vmul.f32 %v698, %v701
    %v704 = vadd.f32 %v694, %v702
    %v705 = vadd.f32 %v695, %v703
    %706 = vset.pattern.permute.xlu0 3
    %707 = vperm.xlu0 %706, %v78
    %v708 = vpop.permute.xlu0 %707
    %v710 = vperm.slane %v667, 3
    %v711 = vperm.slane %v668, 3
    %v712 = vmul.f32 %v708, %v710
    %v713 = vmul.f32 %v708, %v711
    %v714 = vadd.f32 %v704, %v712
    %v715 = vadd.f32 %v705, %v713
    %716 = vset.pattern.permute.xlu0 4
    %717 = vperm.xlu0 %716, %v78
    %v718 = vpop.permute.xlu0 %717
    %v720 = vperm.slane %v667, 4
    %v721 = vperm.slane %v668, 4
    %v722 = vmul.f32 %v718, %v720
    %v723 = vmul.f32 %v718, %v721
    %v724 = vadd.f32 %v714, %v722
    %v725 = vadd.f32 %v715, %v723
    %726 = vset.pattern.permute.xlu0 5
    %727 = vperm.xlu0 %726, %v78
    %v728 = vpop.permute.xlu0 %727
    %v730 = vperm.slane %v667, 5
    %v731 = vperm.slane %v668, 5
    %v732 = vmul.f32 %v728, %v730
    %v733 = vmul.f32 %v728, %v731
    %v734 = vadd.f32 %v724, %v732
    %v735 = vadd.f32 %v725, %v733
    %736 = vset.pattern.permute.xlu0 6
    %737 = vperm.xlu0 %736, %v78
    %v738 = vpop.permute.xlu0 %737
    %v740 = vperm.slane %v667, 6
    %v741 = vperm.slane %v668, 6
    %v742 = vmul.f32 %v738, %v740
    %v743 = vmul.f32 %v738, %v741
    %v744 = vadd.f32 %v734, %v742
    %v745 = vadd.f32 %v735, %v743
    %746 = vset.pattern.permute.xlu0 7
    %747 = vperm.xlu0 %746, %v78
    %v748 = vpop.permute.xlu0 %747
    %v750 = vperm.slane %v667, 7
    %v751 = vperm.slane %v668, 7
    %v752 = vmul.f32 %v748, %v750
    %v753 = vmul.f32 %v748, %v751
    %v754 = vadd.f32 %v744, %v752
    %v755 = vadd.f32 %v745, %v753
    %v756 = vand.u32 2147483647, %v754
    %v757 = vand.u32 2147483647, %v755
    %v758 = vsub.f32 0.0, %v756
    %v759 = vsub.f32 0.0, %v757
    %v760 = vmul.f32 %v758, 1.442695
    %v761 = vpow.pop %v760
    %v762 = vmul.f32 %v759, 1.442695
    %v763 = vpow.pop %v762
    %vm764 = vcmp.ge.f32.partialorder %v754, 0.0
    %vm765 = vcmp.ge.f32.partialorder %v755, 0.0
    %v766 = vsel %vm764, 1.0, %v761
    %v767 = vsel %vm765, 1.0, %v763
    %v768 = vmul.f32 %v754, %v766
    %v769 = vmul.f32 %v755, %v767
    %v770 = vadd.f32 %v761, 1.0
    %v771 = vadd.f32 %v763, 1.0
    %v772 = vrcp.pop %v770
    %v773 = vmul.f32 %v770, %v772
    %v774 = vsub.f32 1.0, %v773
    %v775 = vmul.f32 %v772, %v774
    %v776 = vadd.f32 %v772, %v775
    %vm777 = vweird.f32 %v770
    %vm778 = vweird.f32 %v772
    %vm779 = vmor %vm777, %vm778
    %v780 = vsel %vm779, %v772, %v776
    %v781 = vand.u32 2147483647, %v770
    %vm782 = vcmp.eq.f32.partialorder %v781, 8.507059e+37
    %v783 = vand.u32 %v770, 2147483648
    %v784 = vor.u32 1.1754944e-38, %v783
    %v785 = vsel %vm782, %v784, %v780
    %v786 = vmul.f32 %v768, %v785
    %v787 = vrcp.pop %v771
    %v788 = vmul.f32 %v771, %v787
    %v789 = vsub.f32 1.0, %v788
    %v790 = vmul.f32 %v787, %v789
    %v791 = vadd.f32 %v787, %v790
    %vm792 = vweird.f32 %v771
    %vm793 = vweird.f32 %v787
    %vm794 = vmor %vm792, %vm793
    %v795 = vsel %vm794, %v787, %v791
    %v796 = vand.u32 2147483647, %v771
    %vm797 = vcmp.eq.f32.partialorder %v796, 8.507059e+37
    %v798 = vand.u32 %v771, 2147483648
    %v799 = vor.u32 1.1754944e-38, %v798
    %v800 = vsel %vm797, %v799, %v795
    %v801 = vmul.f32 %v769, %v800
    %802 = vst [vmem:[#allocation10] sm:$0xff] %v786
    %803 = vst [vmem:[#allocation10 + $0x8] sm:$0xff] %v801
    // Predicated region
    $region34: #{tpu_custom_call.1} parent=1 // pred_check
      _
    $region35: #{tpu_custom_call.1} parent=1 // pred_check_branch
      %805 = sbr.rel (0) target = $region37
    $region36: #{tpu_custom_call.1} parent=1 // pred_region
      %807 = vsyncadd [#allocation4], 0
      %s809 = sshll.u32 [#allocation10], 4
      %s810 = int_to_ptr.vmem [resolvable:$true] %s809
      %s811 = sshll.u32 %s4, 4
      %s812 = int_to_ptr.hbm [resolvable:$true] %s811
      %814 = dma.vmem_to_hbm [thread:$0]  %s810, 256, %s812, [#allocation4]
    $region37: #{tpu_custom_call.1} parent=1 // pred_fallthru
      _
    // Predicated region
    $region38: #{tpu_custom_call.1} parent=1 // pred_check
      _
    $region39: #{tpu_custom_call.1} parent=1 // pred_check_branch
      %816 = sbr.rel (0) target = $region41
    $region40: #{tpu_custom_call.1} parent=1 // pred_region
      %818 = dma.done [#allocation4], 256
    $region41: #{tpu_custom_call.1} parent=1 // pred_fallthru
      _
    %819 = vsyncpa [#allocation3], 1
    %820 = vsyncpa [#allocation6], 1
    %821 = vsyncpa [#allocation9], 1
    %822 = vsyncpa [#allocation4], 1

</llo_original>
